<compile_context>
chip_gen: v6e
topology: v6e:2x2x1
jax: 0.10.0
libtpu: 0.0.40
codegen_flags: <defaults>
</compile_context>

<pallas_src>
import functools

import jax
import jax.numpy as jnp
from jax.experimental import pallas as pl
from jax.experimental.pallas import tpu as pltpu


def _round_up(v, m):
    return (v + m - 1) // m * m


def _fused_mlp_kernel(num_layers, *refs):
    """refs = (x_ref, w1_ref, b1_ref, ..., wL_ref, bL_ref, o_ref).

    Computes h = relu(h @ W_l + b_l) for l = 1..L entirely in VMEM/registers:
    bf16 MXU matmuls with f32 accumulation, bias add + ReLU in f32.
    """
    x_ref = refs[0]
    o_ref = refs[-1]
    wb_refs = refs[1:-1]

    h = x_ref[...]                      # bf16 (tm, D0)
    for l in range(num_layers):         # unrolled at trace time (L = 3)
        w_ref = wb_refs[2 * l]
        b_ref = wb_refs[2 * l + 1]
        acc = jnp.dot(h.astype(w_ref.dtype), w_ref[...],
                      preferred_element_type=jnp.float32)
        h = jnp.maximum(acc + b_ref[...], 0.0)   # f32 bias + ReLU
    o_ref[...] = h.astype(o_ref.dtype)


def fused_gnn_mlp(x, params, *, tm_max=512):
    """y = relu(...relu(relu(x @ W1 + b1) @ W2 + b2)...) in one pallas_call.

    x:      [M, D0]  (any M; padded internally)
    params: list of (W [Din, Dout] bf16, b [Dout] f32)
    """
    M, K0 = x.shape
    num_layers = len(params)
    n_out = params[-1][0].shape[1]

    # Row tile: full block for small graphs, capped at tm_max for big ones.
    # Pad M up so the grid divides evenly (padded rows are sliced off below).
    m16 = _round_up(M, 16)              # sublane-friendly for bf16 packing
    tm = min(tm_max, m16)
    m_pad = _round_up(m16, tm)
    grid_m = m_pad // tm

    x_bf16 = x.astype(jnp.bfloat16)
    if m_pad != M:
        x_bf16 = jnp.pad(x_bf16, ((0, m_pad - M), (0, 0)))

    # Flatten (W, b) pairs; biases as lane-dense (1, Dout) f32 rows.
    # Constant (0,0) block index -> fetched once, resident across row tiles.
    flat_args = []
    in_specs = [pl.BlockSpec((tm, K0), lambda i: (i, 0))]
    weight_bytes = 0
    for (w, b) in params:
        din, dout = w.shape
        flat_args.append(w.astype(jnp.bfloat16))
        in_specs.append(pl.BlockSpec((din, dout), lambda i: (0, 0)))
        flat_args.append(b.reshape(1, dout).astype(jnp.float32))
        in_specs.append(pl.BlockSpec((1, dout), lambda i: (0, 0)))
        weight_bytes += w.size * 2 + b.size * 4

    # Advisory cost estimate for the XLA scheduler.
    flops = 0
    for (w, b) in params:
        flops += 2 * m_pad * w.shape[0] * w.shape[1]
    bytes_accessed = x_bf16.size * 2 + m_pad * n_out * 2 + weight_bytes
    cost = pl.CostEstimate(flops=flops, transcendentals=0,
                           bytes_accessed=bytes_accessed)

    # VMEM budget: double-buffered activation tiles + resident weights, with
    # generous headroom (kept well under the 64 MiB v7x per-TC capacity).
    act_tile_bytes = tm * max(K0, n_out) * 2
    vmem_bytes = min(64 << 20, 4 * act_tile_bytes + 2 * weight_bytes + (8 << 20))

    out = pl.pallas_call(
        functools.partial(_fused_mlp_kernel, num_layers),
        out_shape=jax.ShapeDtypeStruct((m_pad, n_out), jnp.bfloat16),
        grid_spec=pltpu.PrefetchScalarGridSpec(
            num_scalar_prefetch=0,
            grid=(grid_m,),
            in_specs=in_specs,
            out_specs=pl.BlockSpec((tm, n_out), lambda i: (i, 0)),
        ),
        # "parallel" lets v7x shard row tiles across both TensorCores; it is a
        # no-op on single-TC v5e/v6e.
        compiler_params=pltpu.CompilerParams(
            dimension_semantics=("parallel",),
            vmem_limit_bytes=int(vmem_bytes)),
        cost_estimate=cost,
    )(x_bf16, *flat_args)

    return out[:M] if m_pad != M else out


class GNNLayerSequence:
    """JAX/Pallas port of the PyTorch GNNLayerSequence container."""

    def __init__(self, layers):
        # layers: list of (W, b) pairs for Linear layers
        self.layers = layers

    def __call__(self, x, node_types, edge_index, edge_type):
        # All layers here are Linear (else-branch of the reference forward:
        # x = layer(x); x = relu(x)), fused into one kernel.
        # TODO(synk): SPropConv layers would need an edge_index gather
        # (scalar prefetch / manual DMA) and are not implemented.
        return fused_gnn_mlp(x, self.layers)


def make_params(key, dims):
    """Deterministic Linear params for dims = [d0, d1, ..., dL]."""
    params = []
    for i in range(len(dims) - 1):
        key, kw, kb = jax.random.split(key, 3)
        fan_in = dims[i]
        bound = 1.0 / jnp.sqrt(fan_in)
        w = jax.random.uniform(kw, (dims[i], dims[i + 1]),
                               minval=-bound, maxval=bound,
                               dtype=jnp.float32).astype(jnp.bfloat16)
        b = jax.random.uniform(kb, (dims[i + 1],),
                               minval=-bound, maxval=bound,
                               dtype=jnp.float32)
        params.append((w, b))
    return params


if __name__ == "__main__":
    key = jax.random.PRNGKey(0)
    k_x, k_p, k_e = jax.random.split(key, 3)

    n_nodes, n_edges = 60, 96            # 60: exercises the ragged-M padding
    dims = [128, 128, 128, 128]          # 3 linear layers, hidden = 128

    x = jax.random.normal(k_x, (n_nodes, dims[0]),
                          dtype=jnp.float32).astype(jnp.bfloat16)
    node_types = jnp.zeros((n_nodes,), dtype=jnp.int32)
    edge_index = jax.random.randint(k_e, (2, n_edges), 0, n_nodes,
                                    dtype=jnp.int32)
    edge_type = jnp.zeros((n_edges,), dtype=jnp.int32)

    params = make_params(k_p, dims)
    model = GNNLayerSequence(params)

    out = model(x, node_types, edge_index, edge_type)
    out = jax.block_until_ready(out)

    # Reference in plain JAX with the identical dtype chain
    # (bf16 matmul inputs, f32 accumulation, f32 bias+ReLU, bf16 output).
    ref = x
    for (w, b) in params:
        acc = jnp.dot(ref.astype(jnp.bfloat16), w.astype(jnp.bfloat16),
                      preferred_element_type=jnp.float32)
        ref = jnp.maximum(acc + b.astype(jnp.float32), 0.0)
    ref = ref.astype(jnp.bfloat16)

    assert out.shape == (n_nodes, dims[-1])
    assert out.dtype == jnp.bfloat16
    assert jnp.allclose(out.astype(jnp.float32), ref.astype(jnp.float32),
                        atol=2e-2, rtol=2e-2)

    print("KERNEL_OK")
</pallas_src>

<mosaic_0001>
module attributes {stable_mosaic.version = 11 : i64} {
  func.func @_fused_mlp_kernel(%arg0: i32, %arg1: memref<64x128xbf16, #tpu.memory_space<vmem>>, %arg2: memref<128x128xbf16, #tpu.memory_space<vmem>>, %arg3: memref<1x128xf32, #tpu.memory_space<vmem>>, %arg4: memref<128x128xbf16, #tpu.memory_space<vmem>>, %arg5: memref<1x128xf32, #tpu.memory_space<vmem>>, %arg6: memref<128x128xbf16, #tpu.memory_space<vmem>>, %arg7: memref<1x128xf32, #tpu.memory_space<vmem>>, %arg8: memref<64x128xbf16, #tpu.memory_space<vmem>>) attributes {dimension_semantics = [#tpu.dimension_semantics<parallel>], iteration_bounds = array<i64: 1>, scalar_prefetch = 0 : i64, scratch_operands = 0 : i64, tpu.core_type = #tpu.core_type<tc>, window_params = [{transform_indices = @transform_0, window_bounds = array<i64: 64, 128>}, {pipeline_mode = #tpu.pipeline_mode<synchronous>, transform_indices = @transform_1, window_bounds = array<i64: 128, 128>}, {pipeline_mode = #tpu.pipeline_mode<synchronous>, transform_indices = @transform_2, window_bounds = array<i64: 1, 128>}, {pipeline_mode = #tpu.pipeline_mode<synchronous>, transform_indices = @transform_3, window_bounds = array<i64: 128, 128>}, {pipeline_mode = #tpu.pipeline_mode<synchronous>, transform_indices = @transform_4, window_bounds = array<i64: 1, 128>}, {pipeline_mode = #tpu.pipeline_mode<synchronous>, transform_indices = @transform_5, window_bounds = array<i64: 128, 128>}, {pipeline_mode = #tpu.pipeline_mode<synchronous>, transform_indices = @transform_6, window_bounds = array<i64: 1, 128>}, {transform_indices = @transform_7, window_bounds = array<i64: 64, 128>}]} {
    %c0 = arith.constant 0 : index
    %c0_0 = arith.constant 0 : index
    %0 = vector.load %arg1[%c0, %c0_0] : memref<64x128xbf16, #tpu.memory_space<vmem>>, vector<64x128xbf16>
    %c0_1 = arith.constant 0 : index
    %c0_2 = arith.constant 0 : index
    %1 = vector.load %arg2[%c0_1, %c0_2] : memref<128x128xbf16, #tpu.memory_space<vmem>>, vector<128x128xbf16>
    %cst = arith.constant dense<0.000000e+00> : vector<64x128xf32>
    %2 = tpu.matmul %0, %1, %cst {dimension_numbers = #tpu.dot_dimension_numbers<[1], [0], [0], [1], [0, 0, 1, 1], [], []>} : vector<64x128xbf16>, vector<128x128xbf16>, vector<64x128xf32> -> vector<64x128xf32>
    %c0_3 = arith.constant 0 : index
    %c0_4 = arith.constant 0 : index
    %3 = vector.load %arg3[%c0_3, %c0_4] : memref<1x128xf32, #tpu.memory_space<vmem>>, vector<1x128xf32>
    %4 = vector.broadcast %3 : vector<1x128xf32> to vector<64x128xf32>
    %5 = arith.addf %2, %4 : vector<64x128xf32>
    %cst_5 = arith.constant 0.000000e+00 : f32
    %6 = vector.broadcast %cst_5 : f32 to vector<64x128xf32>
    %7 = arith.maximumf %5, %6 : vector<64x128xf32>
    %8 = arith.truncf %7 : vector<64x128xf32> to vector<64x128xbf16>
    %c0_6 = arith.constant 0 : index
    %c0_7 = arith.constant 0 : index
    %9 = vector.load %arg4[%c0_6, %c0_7] : memref<128x128xbf16, #tpu.memory_space<vmem>>, vector<128x128xbf16>
    %cst_8 = arith.constant dense<0.000000e+00> : vector<64x128xf32>
    %10 = tpu.matmul %8, %9, %cst_8 {dimension_numbers = #tpu.dot_dimension_numbers<[1], [0], [0], [1], [0, 0, 1, 1], [], []>} : vector<64x128xbf16>, vector<128x128xbf16>, vector<64x128xf32> -> vector<64x128xf32>
    %c0_9 = arith.constant 0 : index
    %c0_10 = arith.constant 0 : index
    %11 = vector.load %arg5[%c0_9, %c0_10] : memref<1x128xf32, #tpu.memory_space<vmem>>, vector<1x128xf32>
    %12 = vector.broadcast %11 : vector<1x128xf32> to vector<64x128xf32>
    %13 = arith.addf %10, %12 : vector<64x128xf32>
    %cst_11 = arith.constant 0.000000e+00 : f32
    %14 = vector.broadcast %cst_11 : f32 to vector<64x128xf32>
    %15 = arith.maximumf %13, %14 : vector<64x128xf32>
    %16 = arith.truncf %15 : vector<64x128xf32> to vector<64x128xbf16>
    %c0_12 = arith.constant 0 : index
    %c0_13 = arith.constant 0 : index
    %17 = vector.load %arg6[%c0_12, %c0_13] : memref<128x128xbf16, #tpu.memory_space<vmem>>, vector<128x128xbf16>
    %cst_14 = arith.constant dense<0.000000e+00> : vector<64x128xf32>
    %18 = tpu.matmul %16, %17, %cst_14 {dimension_numbers = #tpu.dot_dimension_numbers<[1], [0], [0], [1], [0, 0, 1, 1], [], []>} : vector<64x128xbf16>, vector<128x128xbf16>, vector<64x128xf32> -> vector<64x128xf32>
    %c0_15 = arith.constant 0 : index
    %c0_16 = arith.constant 0 : index
    %19 = vector.load %arg7[%c0_15, %c0_16] : memref<1x128xf32, #tpu.memory_space<vmem>>, vector<1x128xf32>
    %20 = vector.broadcast %19 : vector<1x128xf32> to vector<64x128xf32>
    %21 = arith.addf %18, %20 : vector<64x128xf32>
    %cst_17 = arith.constant 0.000000e+00 : f32
    %22 = vector.broadcast %cst_17 : f32 to vector<64x128xf32>
    %23 = arith.maximumf %21, %22 : vector<64x128xf32>
    %24 = arith.truncf %23 : vector<64x128xf32> to vector<64x128xbf16>
    %c0_18 = arith.constant 0 : index
    %c0_19 = arith.constant 0 : index
    %25 = vector.load %arg8[%c0_18, %c0_19] : memref<64x128xbf16, #tpu.memory_space<vmem>>, vector<64x128xbf16>
    tpu.vector_store %arg8[%c0_18, %c0_19], %24 {strides = array<i32>} : memref<64x128xbf16, #tpu.memory_space<vmem>>, vector<64x128xbf16>,
    return
  }
  func.func @transform_0(%arg0: i32) -> (i32, i32) {
    %c0_i32 = arith.constant 0 : i32
    %c0_i32_0 = arith.constant 0 : i32
    return %arg0, %c0_i32 : i32, i32
  }
  func.func @transform_1(%arg0: i32) -> (i32, i32) {
    %c0_i32 = arith.constant 0 : i32
    %c0_i32_0 = arith.constant 0 : i32
    %c0_i32_1 = arith.constant 0 : i32
    return %c0_i32, %c0_i32_0 : i32, i32
  }
  func.func @transform_2(%arg0: i32) -> (i32, i32) {
    %c0_i32 = arith.constant 0 : i32
    %c0_i32_0 = arith.constant 0 : i32
    %c0_i32_1 = arith.constant 0 : i32
    return %c0_i32, %c0_i32_0 : i32, i32
  }
  func.func @transform_3(%arg0: i32) -> (i32, i32) {
    %c0_i32 = arith.constant 0 : i32
    %c0_i32_0 = arith.constant 0 : i32
    %c0_i32_1 = arith.constant 0 : i32
    return %c0_i32, %c0_i32_0 : i32, i32
  }
  func.func @transform_4(%arg0: i32) -> (i32, i32) {
    %c0_i32 = arith.constant 0 : i32
    %c0_i32_0 = arith.constant 0 : i32
    %c0_i32_1 = arith.constant 0 : i32
    return %c0_i32, %c0_i32_0 : i32, i32
  }
  func.func @transform_5(%arg0: i32) -> (i32, i32) {
    %c0_i32 = arith.constant 0 : i32
    %c0_i32_0 = arith.constant 0 : i32
    %c0_i32_1 = arith.constant 0 : i32
    return %c0_i32, %c0_i32_0 : i32, i32
  }
  func.func @transform_6(%arg0: i32) -> (i32, i32) {
    %c0_i32 = arith.constant 0 : i32
    %c0_i32_0 = arith.constant 0 : i32
    %c0_i32_1 = arith.constant 0 : i32
    return %c0_i32, %c0_i32_0 : i32, i32
  }
  func.func @transform_7(%arg0: i32) -> (i32, i32) {
    %c0_i32 = arith.constant 0 : i32
    %c0_i32_0 = arith.constant 0 : i32
    return %arg0, %c0_i32 : i32, i32
  }
}

</mosaic_0001>

<llo_original>
// kernel: tpu_custom_call.1
$region0: #{tpu_custom_call.1}
  #allocation0 [shape = 'u32[]', space=smem, size = 0x4, offset = 0x4, fixed_abs, tag = 'smem constant byte address 0x4 - core index']
  #allocation1 [shape = 'u32[144,128]{1,0:T(1,128)}', space=vmem, size = 0x12000, scoped, tag = 'internal scratch']
  %s0 = inlined_call_operand.hbm [shape: bf16[64,128], index: 0, kind: input, shape index: {}]
  %s1 = inlined_call_operand.hbm [shape: bf16[128,128], index: 1, kind: input, shape index: {}]
  %s2 = inlined_call_operand.vmem [shape: f32[1,128], index: 2, kind: input, shape index: {}]
  %s3 = inlined_call_operand.hbm [shape: bf16[128,128], index: 3, kind: input, shape index: {}]
  %s4 = inlined_call_operand.vmem [shape: f32[1,128], index: 4, kind: input, shape index: {}]
  %s5 = inlined_call_operand.hbm [shape: bf16[128,128], index: 5, kind: input, shape index: {}]
  %s6 = inlined_call_operand.vmem [shape: f32[1,128], index: 6, kind: input, shape index: {}]
  %s7 = inlined_call_operand.hbm [shape: bf16[64,128], index: 7, kind: output, shape index: {}]
  %s8 = sld [smem:[#allocation0]]
  $region54: #{tpu_custom_call.1} parent=0
    _
  %s10 = ssub.s32 1, %s8
  %s11 = scalar_select 0, %s10, %s8
  $region1: #{tpu_custom_call.1} parent=0
    #allocation2 [shape = 'u8[16384]{0}', space=vmem, size = 0x4000, scoped, tag = 'input window, operand 0, single buffered']
    #allocation3 [shape = 's32[1]{0}', space=sflag, size = 0x4, scoped, tag = 'scoped memory for tpu_custom_call.1']
    #allocation4 [shape = 's32[1]{0}', space=sflag, size = 0x4, scoped, tag = 'scoped memory for tpu_custom_call.1']
    #allocation5 [shape = 'u8[32768]{0}', space=vmem, size = 0x8000, scoped, tag = 'input window, operand 1, single buffered']
    #allocation6 [shape = 's32[1]{0}', space=sflag, size = 0x4, scoped, tag = 'scoped memory for tpu_custom_call.1']
    #allocation7 [shape = 'u8[32768]{0}', space=vmem, size = 0x8000, scoped, tag = 'input window, operand 3, single buffered']
    #allocation8 [shape = 'u8[32768]{0}', space=vmem, size = 0x8000, scoped, tag = 'input window, operand 5, single buffered']
    #allocation9 [shape = 's32[1]{0}', space=sflag, size = 0x4, scoped, tag = 'scoped memory for tpu_custom_call.1']
    #allocation10 [shape = 'u8[16384]{0}', space=vmem, size = 0x4000, scoped, tag = 'output window, operand 0, single buffered']
    %12 = vsyncpa [#allocation3], 0
    %13 = vsyncpa [#allocation6], 0
    %14 = vsyncpa [#allocation9], 0
    %15 = vsyncpa [#allocation4], 0
    // Predicated region
    $region2: #{tpu_custom_call.1} parent=1 // pred_check
      _
    $region3: #{tpu_custom_call.1} parent=1 // pred_check_branch
      %17 = sbr.rel (0) target = $region5
    $region4: #{tpu_custom_call.1} parent=1 // pred_region
      %s19 = ssub.s32 512, 512
      %20 = vsyncadd [#allocation3], %s19
      %s21 = sshll.u32 [#allocation2], 4
      %s22 = int_to_ptr.vmem [resolvable:$true] %s21
      %27 = dma.hbm_to_vmem [thread:$0]  %s0, 512, %s22, [#allocation3], 64, 64, 4
    $region5: #{tpu_custom_call.1} parent=1 // pred_fallthru
      _
    // Predicated region
    $region6: #{tpu_custom_call.1} parent=1 // pred_check
      _
    $region7: #{tpu_custom_call.1} parent=1 // pred_check_branch
      %29 = sbr.rel (0) target = $region9
    $region8: #{tpu_custom_call.1} parent=1 // pred_region
      %s31 = ssub.s32 1024, 1024
      %32 = vsyncadd [#allocation6], %s31
      %s33 = sshll.u32 [#allocation5], 4
      %s34 = int_to_ptr.vmem [resolvable:$true] %s33
      %39 = dma.hbm_to_vmem [thread:$0]  %s1, 1024, %s34, [#allocation6], 64, 64, 4
    $region9: #{tpu_custom_call.1} parent=1 // pred_fallthru
      _
    // Predicated region
    $region10: #{tpu_custom_call.1} parent=1 // pred_check
      _
    $region11: #{tpu_custom_call.1} parent=1 // pred_check_branch
      %41 = sbr.rel (0) target = $region13
    $region12: #{tpu_custom_call.1} parent=1 // pred_region
      _
    $region13: #{tpu_custom_call.1} parent=1 // pred_fallthru
      _
    // Predicated region
    $region14: #{tpu_custom_call.1} parent=1 // pred_check
      _
    $region15: #{tpu_custom_call.1} parent=1 // pred_check_branch
      %43 = sbr.rel (0) target = $region17
    $region16: #{tpu_custom_call.1} parent=1 // pred_region
      %s45 = ssub.s32 1024, 1024
      %46 = vsyncadd [#allocation6], %s45
      %s47 = sshll.u32 [#allocation7], 4
      %s48 = int_to_ptr.vmem [resolvable:$true] %s47
      %53 = dma.hbm_to_vmem [thread:$0]  %s3, 1024, %s48, [#allocation6], 64, 64, 4
    $region17: #{tpu_custom_call.1} parent=1 // pred_fallthru
      _
    // Predicated region
    $region18: #{tpu_custom_call.1} parent=1 // pred_check
      _
    $region19: #{tpu_custom_call.1} parent=1 // pred_check_branch
      %55 = sbr.rel (0) target = $region21
    $region20: #{tpu_custom_call.1} parent=1 // pred_region
      _
    $region21: #{tpu_custom_call.1} parent=1 // pred_fallthru
      _
    // Predicated region
    $region22: #{tpu_custom_call.1} parent=1 // pred_check
      _
    $region23: #{tpu_custom_call.1} parent=1 // pred_check_branch
      %57 = sbr.rel (0) target = $region25
    $region24: #{tpu_custom_call.1} parent=1 // pred_region
      %s59 = ssub.s32 1024, 1024
      %60 = vsyncadd [#allocation9], %s59
      %s61 = sshll.u32 [#allocation8], 4
      %s62 = int_to_ptr.vmem [resolvable:$true] %s61
      %67 = dma.hbm_to_vmem [thread:$0]  %s5, 1024, %s62, [#allocation9], 64, 64, 4
    $region25: #{tpu_custom_call.1} parent=1 // pred_fallthru
      _
    // Predicated region
    $region26: #{tpu_custom_call.1} parent=1 // pred_check
      _
    $region27: #{tpu_custom_call.1} parent=1 // pred_check_branch
      %69 = sbr.rel (0) target = $region29
    $region28: #{tpu_custom_call.1} parent=1 // pred_region
      _
    $region29: #{tpu_custom_call.1} parent=1 // pred_fallthru
      _
    // Predicated region
    $region30: #{tpu_custom_call.1} parent=1 // pred_check
      _
    $region31: #{tpu_custom_call.1} parent=1 // pred_check_branch
      %71 = sbr.rel (0) target = $region33
    $region32: #{tpu_custom_call.1} parent=1 // pred_region
      %72 = dma.done [#allocation3], 512
    $region33: #{tpu_custom_call.1} parent=1 // pred_fallthru
      _
    // Predicated region
    $region34: #{tpu_custom_call.1} parent=1 // pred_check
      _
    $region35: #{tpu_custom_call.1} parent=1 // pred_check_branch
      %74 = sbr.rel (0) target = $region37
    $region36: #{tpu_custom_call.1} parent=1 // pred_region
      %75 = dma.done [#allocation6], 1024
    $region37: #{tpu_custom_call.1} parent=1 // pred_fallthru
      _
    // Predicated region
    $region38: #{tpu_custom_call.1} parent=1 // pred_check
      _
    $region39: #{tpu_custom_call.1} parent=1 // pred_check_branch
      %77 = sbr.rel (0) target = $region41
    $region40: #{tpu_custom_call.1} parent=1 // pred_region
      %78 = dma.done [#allocation6], 1024
    $region41: #{tpu_custom_call.1} parent=1 // pred_fallthru
      _
    // Predicated region
    $region42: #{tpu_custom_call.1} parent=1 // pred_check
      _
    $region43: #{tpu_custom_call.1} parent=1 // pred_check_branch
      %80 = sbr.rel (0) target = $region45
    $region44: #{tpu_custom_call.1} parent=1 // pred_region
      %81 = dma.done [#allocation9], 1024
    $region45: #{tpu_custom_call.1} parent=1 // pred_fallthru
      _
    %v83 = vld [vmem:[#allocation2] sm:$0xf]
    %v84 = vld [vmem:[#allocation2 + $0x4] sm:$0xf]
    %v85 = vld [vmem:[#allocation2 + $0x8] sm:$0xf]
    %v86 = vld [vmem:[#allocation2 + $0xc] sm:$0xf]
    %v87 = vld [vmem:[#allocation2 + $0x10] sm:$0xf]
    %v88 = vld [vmem:[#allocation2 + $0x14] sm:$0xf]
    %v89 = vld [vmem:[#allocation2 + $0x18] sm:$0xf]
    %v90 = vld [vmem:[#allocation2 + $0x1c] sm:$0xf]
    %v91 = vld [vmem:[#allocation5] sm:$0xf]
    %v92 = vld [vmem:[#allocation5 + $0x4] sm:$0xf]
    %v93 = vld [vmem:[#allocation5 + $0x8] sm:$0xf]
    %v94 = vld [vmem:[#allocation5 + $0xc] sm:$0xf]
    %v95 = vld [vmem:[#allocation5 + $0x10] sm:$0xf]
    %v96 = vld [vmem:[#allocation5 + $0x14] sm:$0xf]
    %v97 = vld [vmem:[#allocation5 + $0x18] sm:$0xf]
    %v98 = vld [vmem:[#allocation5 + $0x1c] sm:$0xf]
    %v99 = vld [vmem:[#allocation5 + $0x20] sm:$0xf]
    %v100 = vld [vmem:[#allocation5 + $0x24] sm:$0xf]
    %v101 = vld [vmem:[#allocation5 + $0x28] sm:$0xf]
    %v102 = vld [vmem:[#allocation5 + $0x2c] sm:$0xf]
    %v103 = vld [vmem:[#allocation5 + $0x30] sm:$0xf]
    %v104 = vld [vmem:[#allocation5 + $0x34] sm:$0xf]
    %v105 = vld [vmem:[#allocation5 + $0x38] sm:$0xf]
    %v106 = vld [vmem:[#allocation5 + $0x3c] sm:$0xf]
    %v107 = vld [vmem:[%s2] sm:$0x1]
    %v109 = vlaneseq
    %v110 = vshrl.u32 %v109, 7
    %v111 = vsub.s32 0, %v110
    %v112 = vrot.slane %v107, %v111
    %v122 = vunpack.c.l.b16 %v83
    %v123 = vunpack.c.l.b16 %v84
    %v124 = vunpack.c.l.b16 %v85
    %v125 = vunpack.c.l.b16 %v86
    %v126 = vunpack.c.l.b16 %v87
    %v127 = vunpack.c.l.b16 %v88
    %v128 = vunpack.c.l.b16 %v89
    %v129 = vunpack.c.l.b16 %v90
    %v130 = vpack.c.b16 %v123, %v122
    %v131 = vpack.c.b16 %v125, %v124
    %v132 = vpack.c.b16 %v127, %v126
    %v133 = vpack.c.b16 %v129, %v128
    %v154 = vunpack.c.l.b16 %v91
    %v155 = vunpack.c.l.b16 %v92
    %v156 = vunpack.c.l.b16 %v93
    %v157 = vunpack.c.l.b16 %v94
    %v158 = vunpack.c.l.b16 %v95
    %v159 = vunpack.c.l.b16 %v96
    %v160 = vunpack.c.l.b16 %v97
    %v161 = vunpack.c.l.b16 %v98
    %v162 = vunpack.c.l.b16 %v99
    %v163 = vunpack.c.l.b16 %v100
    %v164 = vunpack.c.l.b16 %v101
    %v165 = vunpack.c.l.b16 %v102
    %v166 = vunpack.c.l.b16 %v103
    %v167 = vunpack.c.l.b16 %v104
    %v168 = vunpack.c.l.b16 %v105
    %v169 = vunpack.c.l.b16 %v106
    %v170 = vpack.c.b16 %v155, %v154
    %v171 = vpack.c.b16 %v157, %v156
    %v172 = vpack.c.b16 %v159, %v158
    %v173 = vpack.c.b16 %v161, %v160
    %v174 = vpack.c.b16 %v163, %v162
    %v175 = vpack.c.b16 %v165, %v164
    %v176 = vpack.c.b16 %v167, %v166
    %v177 = vpack.c.b16 %v169, %v168
    %186 = vmatprep.subr.bf16.mxu0 0
    %187 = vmatpush1.bf16.msra.mxu0 %v177
    %188 = vmatprep.subr.bf16.mxu0 0
    %189 = vmatpush1.bf16.msra.mxu0 %v176
    %190 = vmatprep.subr.bf16.mxu0 0
    %191 = vmatpush1.bf16.msra.mxu0 %v175
    %192 = vmatprep.subr.bf16.mxu0 0
    %193 = vmatpush1.bf16.msra.mxu0 %v174
    %194 = vmatprep.subr.bf16.mxu0 0
    %195 = vmatpush1.bf16.msra.mxu0 %v173
    %196 = vmatprep.subr.bf16.mxu0 0
    %197 = vmatpush1.bf16.msra.mxu0 %v172
    %198 = vmatprep.subr.bf16.mxu0 0
    %199 = vmatpush1.bf16.msra.mxu0 %v171
    %200 = vmatprep.subr.bf16.mxu0 0
    %201 = vmatpush1.bf16.msra.mxu0 %v170
    %202 = vmatprep.subr.bf16.mxu0 0
    %203 = vmatpush2.bf16.msra.mxu0 0
    %204 = vmatprep.subr.bf16.mxu0 0
    %205 = vmatpush2.bf16.msra.mxu0 0
    %206 = vmatprep.subr.bf16.mxu0 0
    %207 = vmatpush2.bf16.msra.mxu0 0
    %208 = vmatprep.subr.bf16.mxu0 0
    %209 = vmatpush2.bf16.msra.mxu0 0
    %210 = vmatprep.subr.bf16.mxu0 0
    %211 = vmatpush2.bf16.msra.mxu0 0
    %212 = vmatprep.subr.bf16.mxu0 0
    %213 = vmatpush2.bf16.msra.mxu0 0
    %214 = vmatprep.subr.bf16.mxu0 0
    %215 = vmatpush2.bf16.msra.mxu0 0
    %216 = vmatprep.subr.bf16.mxu0 0
    %217 = vmatpush2.bf16.msra.mxu0 0
    %218 = vmatprep.mubr.bf16.mxu0 0
    %219 = vmatmul.mubr.bf16.gmra.mxu0 %v130
    %v220 = vpop.f32.mrf.mxu0
    %v221 = vadd.f32 %v112, %v220
    %v222 = vpop.f32.mrf.mxu0
    %v223 = vpop.f32.mrf.mxu0
    %v224 = vadd.f32 %v112, %v223
    %v225 = vpop.f32.mrf.mxu0
    %226 = vmatprep.mubr.bf16.mxu0 0
    %227 = vmatmul.mubr.bf16.gmra.mxu0 %v131
    %v228 = vpop.f32.mrf.mxu0
    %v229 = vadd.f32 %v112, %v228
    %v230 = vpop.f32.mrf.mxu0
    %v231 = vpop.f32.mrf.mxu0
    %v232 = vadd.f32 %v112, %v231
    %v233 = vpop.f32.mrf.mxu0
    %234 = vmatprep.mubr.bf16.mxu0 0
    %235 = vmatmul.mubr.bf16.gmra.mxu0 %v132
    %v236 = vpop.f32.mrf.mxu0
    %v237 = vadd.f32 %v112, %v236
    %v238 = vpop.f32.mrf.mxu0
    %v239 = vpop.f32.mrf.mxu0
    %v240 = vadd.f32 %v112, %v239
    %v241 = vpop.f32.mrf.mxu0
    %242 = vmatprep.mubr.bf16.mxu0 0
    %243 = vmatmul.mubr.bf16.gmra.mxu0 %v133
    %v244 = vpop.f32.mrf.mxu0
    %v245 = vadd.f32 %v112, %v244
    %v246 = vpop.f32.mrf.mxu0
    %v247 = vpop.f32.mrf.mxu0
    %v248 = vadd.f32 %v112, %v247
    %v249 = vpop.f32.mrf.mxu0
    %250 = vdwg.mxu0
    %v251 = vmax.f32 %v221, 0.0
    %v252 = vmax.f32 %v224, 0.0
    %v253 = vmax.f32 %v229, 0.0
    %v254 = vmax.f32 %v232, 0.0
    %v255 = vmax.f32 %v237, 0.0
    %v256 = vmax.f32 %v240, 0.0
    %v257 = vmax.f32 %v245, 0.0
    %v258 = vmax.f32 %v248, 0.0
    %v259 = vpack.c.bf16 %v252, %v251
    %v260 = vpack.c.bf16 %v254, %v253
    %v261 = vpack.c.bf16 %v256, %v255
    %v262 = vpack.c.bf16 %v258, %v257
    %v263 = vld [vmem:[#allocation7] sm:$0xf]
    %v264 = vld [vmem:[#allocation7 + $0x4] sm:$0xf]
    %v265 = vld [vmem:[#allocation7 + $0x8] sm:$0xf]
    %v266 = vld [vmem:[#allocation7 + $0xc] sm:$0xf]
    %v267 = vld [vmem:[#allocation7 + $0x10] sm:$0xf]
    %v268 = vld [vmem:[#allocation7 + $0x14] sm:$0xf]
    %v269 = vld [vmem:[#allocation7 + $0x18] sm:$0xf]
    %v270 = vld [vmem:[#allocation7 + $0x1c] sm:$0xf]
    %v271 = vld [vmem:[#allocation7 + $0x20] sm:$0xf]
    %v272 = vld [vmem:[#allocation7 + $0x24] sm:$0xf]
    %v273 = vld [vmem:[#allocation7 + $0x28] sm:$0xf]
    %v274 = vld [vmem:[#allocation7 + $0x2c] sm:$0xf]
    %v275 = vld [vmem:[#allocation7 + $0x30] sm:$0xf]
    %v276 = vld [vmem:[#allocation7 + $0x34] sm:$0xf]
    %v277 = vld [vmem:[#allocation7 + $0x38] sm:$0xf]
    %v278 = vld [vmem:[#allocation7 + $0x3c] sm:$0xf]
    %v279 = vld [vmem:[%s4] sm:$0x1]
    %v281 = vlaneseq
    %v282 = vshrl.u32 %v281, 7
    %v283 = vsub.s32 0, %v282
    %v284 = vrot.slane %v279, %v283
    %v302 = vunpack.c.l.b16 %v263
    %v303 = vunpack.c.l.b16 %v264
    %v304 = vunpack.c.l.b16 %v265
    %v305 = vunpack.c.l.b16 %v266
    %v306 = vunpack.c.l.b16 %v267
    %v307 = vunpack.c.l.b16 %v268
    %v308 = vunpack.c.l.b16 %v269
    %v309 = vunpack.c.l.b16 %v270
    %v310 = vunpack.c.l.b16 %v271
    %v311 = vunpack.c.l.b16 %v272
    %v312 = vunpack.c.l.b16 %v273
    %v313 = vunpack.c.l.b16 %v274
    %v314 = vunpack.c.l.b16 %v275
    %v315 = vunpack.c.l.b16 %v276
    %v316 = vunpack.c.l.b16 %v277
    %v317 = vunpack.c.l.b16 %v278
    %v318 = vpack.c.b16 %v303, %v302
    %v319 = vpack.c.b16 %v305, %v304
    %v320 = vpack.c.b16 %v307, %v306
    %v321 = vpack.c.b16 %v309, %v308
    %v322 = vpack.c.b16 %v311, %v310
    %v323 = vpack.c.b16 %v313, %v312
    %v324 = vpack.c.b16 %v315, %v314
    %v325 = vpack.c.b16 %v317, %v316
    %334 = vmatprep.subr.bf16.mxu0 0
    %335 = vmatpush1.bf16.msra.mxu0 %v325
    %336 = vmatprep.subr.bf16.mxu0 0
    %337 = vmatpush1.bf16.msra.mxu0 %v324
    %338 = vmatprep.subr.bf16.mxu0 0
    %339 = vmatpush1.bf16.msra.mxu0 %v323
    %340 = vmatprep.subr.bf16.mxu0 0
    %341 = vmatpush1.bf16.msra.mxu0 %v322
    %342 = vmatprep.subr.bf16.mxu0 0
    %343 = vmatpush1.bf16.msra.mxu0 %v321
    %344 = vmatprep.subr.bf16.mxu0 0
    %345 = vmatpush1.bf16.msra.mxu0 %v320
    %346 = vmatprep.subr.bf16.mxu0 0
    %347 = vmatpush1.bf16.msra.mxu0 %v319
    %348 = vmatprep.subr.bf16.mxu0 0
    %349 = vmatpush1.bf16.msra.mxu0 %v318
    %350 = vmatprep.subr.bf16.mxu0 0
    %351 = vmatpush2.bf16.msra.mxu0 0
    %352 = vmatprep.subr.bf16.mxu0 0
    %353 = vmatpush2.bf16.msra.mxu0 0
    %354 = vmatprep.subr.bf16.mxu0 0
    %355 = vmatpush2.bf16.msra.mxu0 0
    %356 = vmatprep.subr.bf16.mxu0 0
    %357 = vmatpush2.bf16.msra.mxu0 0
    %358 = vmatprep.subr.bf16.mxu0 0
    %359 = vmatpush2.bf16.msra.mxu0 0
    %360 = vmatprep.subr.bf16.mxu0 0
    %361 = vmatpush2.bf16.msra.mxu0 0
    %362 = vmatprep.subr.bf16.mxu0 0
    %363 = vmatpush2.bf16.msra.mxu0 0
    %364 = vmatprep.subr.bf16.mxu0 0
    %365 = vmatpush2.bf16.msra.mxu0 0
    %366 = vmatprep.mubr.bf16.mxu0 0
    %367 = vmatmul.mubr.bf16.gmra.mxu0 %v259
    %v368 = vpop.f32.mrf.mxu0
    %v369 = vadd.f32 %v284, %v368
    %v370 = vpop.f32.mrf.mxu0
    %v371 = vpop.f32.mrf.mxu0
    %v372 = vadd.f32 %v284, %v371
    %v373 = vpop.f32.mrf.mxu0
    %374 = vmatprep.mubr.bf16.mxu0 0
    %375 = vmatmul.mubr.bf16.gmra.mxu0 %v260
    %v376 = vpop.f32.mrf.mxu0
    %v377 = vadd.f32 %v284, %v376
    %v378 = vpop.f32.mrf.mxu0
    %v379 = vpop.f32.mrf.mxu0
    %v380 = vadd.f32 %v284, %v379
    %v381 = vpop.f32.mrf.mxu0
    %382 = vmatprep.mubr.bf16.mxu0 0
    %383 = vmatmul.mubr.bf16.gmra.mxu0 %v261
    %v384 = vpop.f32.mrf.mxu0
    %v385 = vadd.f32 %v284, %v384
    %v386 = vpop.f32.mrf.mxu0
    %v387 = vpop.f32.mrf.mxu0
    %v388 = vadd.f32 %v284, %v387
    %v389 = vpop.f32.mrf.mxu0
    %390 = vmatprep.mubr.bf16.mxu0 0
    %391 = vmatmul.mubr.bf16.gmra.mxu0 %v262
    %v392 = vpop.f32.mrf.mxu0
    %v393 = vadd.f32 %v284, %v392
    %v394 = vpop.f32.mrf.mxu0
    %v395 = vpop.f32.mrf.mxu0
    %v396 = vadd.f32 %v284, %v395
    %v397 = vpop.f32.mrf.mxu0
    %398 = vdwg.mxu0
    %v399 = vmax.f32 %v369, 0.0
    %v400 = vmax.f32 %v372, 0.0
    %v401 = vmax.f32 %v377, 0.0
    %v402 = vmax.f32 %v380, 0.0
    %v403 = vmax.f32 %v385, 0.0
    %v404 = vmax.f32 %v388, 0.0
    %v405 = vmax.f32 %v393, 0.0
    %v406 = vmax.f32 %v396, 0.0
    %v407 = vpack.c.bf16 %v400, %v399
    %v408 = vpack.c.bf16 %v402, %v401
    %v409 = vpack.c.bf16 %v404, %v403
    %v410 = vpack.c.bf16 %v406, %v405
    %v411 = vld [vmem:[#allocation8] sm:$0xf]
    %v412 = vld [vmem:[#allocation8 + $0x4] sm:$0xf]
    %v413 = vld [vmem:[#allocation8 + $0x8] sm:$0xf]
    %v414 = vld [vmem:[#allocation8 + $0xc] sm:$0xf]
    %v415 = vld [vmem:[#allocation8 + $0x10] sm:$0xf]
    %v416 = vld [vmem:[#allocation8 + $0x14] sm:$0xf]
    %v417 = vld [vmem:[#allocation8 + $0x18] sm:$0xf]
    %v418 = vld [vmem:[#allocation8 + $0x1c] sm:$0xf]
    %v419 = vld [vmem:[#allocation8 + $0x20] sm:$0xf]
    %v420 = vld [vmem:[#allocation8 + $0x24] sm:$0xf]
    %v421 = vld [vmem:[#allocation8 + $0x28] sm:$0xf]
    %v422 = vld [vmem:[#allocation8 + $0x2c] sm:$0xf]
    %v423 = vld [vmem:[#allocation8 + $0x30] sm:$0xf]
    %v424 = vld [vmem:[#allocation8 + $0x34] sm:$0xf]
    %v425 = vld [vmem:[#allocation8 + $0x38] sm:$0xf]
    %v426 = vld [vmem:[#allocation8 + $0x3c] sm:$0xf]
    %v427 = vld [vmem:[%s6] sm:$0x1]
    %v429 = vlaneseq
    %v430 = vshrl.u32 %v429, 7
    %v431 = vsub.s32 0, %v430
    %v432 = vrot.slane %v427, %v431
    %v450 = vunpack.c.l.b16 %v411
    %v451 = vunpack.c.l.b16 %v412
    %v452 = vunpack.c.l.b16 %v413
    %v453 = vunpack.c.l.b16 %v414
    %v454 = vunpack.c.l.b16 %v415
    %v455 = vunpack.c.l.b16 %v416
    %v456 = vunpack.c.l.b16 %v417
    %v457 = vunpack.c.l.b16 %v418
    %v458 = vunpack.c.l.b16 %v419
    %v459 = vunpack.c.l.b16 %v420
    %v460 = vunpack.c.l.b16 %v421
    %v461 = vunpack.c.l.b16 %v422
    %v462 = vunpack.c.l.b16 %v423
    %v463 = vunpack.c.l.b16 %v424
    %v464 = vunpack.c.l.b16 %v425
    %v465 = vunpack.c.l.b16 %v426
    %v466 = vpack.c.b16 %v451, %v450
    %v467 = vpack.c.b16 %v453, %v452
    %v468 = vpack.c.b16 %v455, %v454
    %v469 = vpack.c.b16 %v457, %v456
    %v470 = vpack.c.b16 %v459, %v458
    %v471 = vpack.c.b16 %v461, %v460
    %v472 = vpack.c.b16 %v463, %v462
    %v473 = vpack.c.b16 %v465, %v464
    %482 = vmatprep.subr.bf16.mxu0 0
    %483 = vmatpush1.bf16.msra.mxu0 %v473
    %484 = vmatprep.subr.bf16.mxu0 0
    %485 = vmatpush1.bf16.msra.mxu0 %v472
    %486 = vmatprep.subr.bf16.mxu0 0
    %487 = vmatpush1.bf16.msra.mxu0 %v471
    %488 = vmatprep.subr.bf16.mxu0 0
    %489 = vmatpush1.bf16.msra.mxu0 %v470
    %490 = vmatprep.subr.bf16.mxu0 0
    %491 = vmatpush1.bf16.msra.mxu0 %v469
    %492 = vmatprep.subr.bf16.mxu0 0
    %493 = vmatpush1.bf16.msra.mxu0 %v468
    %494 = vmatprep.subr.bf16.mxu0 0
    %495 = vmatpush1.bf16.msra.mxu0 %v467
    %496 = vmatprep.subr.bf16.mxu0 0
    %497 = vmatpush1.bf16.msra.mxu0 %v466
    %498 = vmatprep.subr.bf16.mxu0 0
    %499 = vmatpush2.bf16.msra.mxu0 0
    %500 = vmatprep.subr.bf16.mxu0 0
    %501 = vmatpush2.bf16.msra.mxu0 0
    %502 = vmatprep.subr.bf16.mxu0 0
    %503 = vmatpush2.bf16.msra.mxu0 0
    %504 = vmatprep.subr.bf16.mxu0 0
    %505 = vmatpush2.bf16.msra.mxu0 0
    %506 = vmatprep.subr.bf16.mxu0 0
    %507 = vmatpush2.bf16.msra.mxu0 0
    %508 = vmatprep.subr.bf16.mxu0 0
    %509 = vmatpush2.bf16.msra.mxu0 0
    %510 = vmatprep.subr.bf16.mxu0 0
    %511 = vmatpush2.bf16.msra.mxu0 0
    %512 = vmatprep.subr.bf16.mxu0 0
    %513 = vmatpush2.bf16.msra.mxu0 0
    %514 = vmatprep.mubr.bf16.mxu0 0
    %515 = vmatmul.mubr.bf16.gmra.mxu0 %v407
    %v516 = vpop.f32.mrf.mxu0
    %v517 = vadd.f32 %v432, %v516
    %v518 = vpop.f32.mrf.mxu0
    %v519 = vpop.f32.mrf.mxu0
    %v520 = vadd.f32 %v432, %v519
    %v521 = vpop.f32.mrf.mxu0
    %522 = vmatprep.mubr.bf16.mxu0 0
    %523 = vmatmul.mubr.bf16.gmra.mxu0 %v408
    %v524 = vpop.f32.mrf.mxu0
    %v525 = vadd.f32 %v432, %v524
    %v526 = vpop.f32.mrf.mxu0
    %v527 = vpop.f32.mrf.mxu0
    %v528 = vadd.f32 %v432, %v527
    %v529 = vpop.f32.mrf.mxu0
    %530 = vmatprep.mubr.bf16.mxu0 0
    %531 = vmatmul.mubr.bf16.gmra.mxu0 %v409
    %v532 = vpop.f32.mrf.mxu0
    %v533 = vadd.f32 %v432, %v532
    %v534 = vpop.f32.mrf.mxu0
    %v535 = vpop.f32.mrf.mxu0
    %v536 = vadd.f32 %v432, %v535
    %v537 = vpop.f32.mrf.mxu0
    %538 = vmatprep.mubr.bf16.mxu0 0
    %539 = vmatmul.mubr.bf16.gmra.mxu0 %v410
    %v540 = vpop.f32.mrf.mxu0
    %v541 = vadd.f32 %v432, %v540
    %v542 = vpop.f32.mrf.mxu0
    %v543 = vpop.f32.mrf.mxu0
    %v544 = vadd.f32 %v432, %v543
    %v545 = vpop.f32.mrf.mxu0
    %546 = vdwg.mxu0
    %v547 = vmax.f32 %v517, 0.0
    %v548 = vmax.f32 %v520, 0.0
    %v549 = vmax.f32 %v525, 0.0
    %v550 = vmax.f32 %v528, 0.0
    %v551 = vmax.f32 %v533, 0.0
    %v552 = vmax.f32 %v536, 0.0
    %v553 = vmax.f32 %v541, 0.0
    %v554 = vmax.f32 %v544, 0.0
    %v555 = vpack.c.bf16 %v548, %v547
    %v556 = vpack.c.bf16 %v550, %v549
    %v557 = vpack.c.bf16 %v552, %v551
    %v558 = vpack.c.bf16 %v554, %v553
    %v563 = vunpack.c.l.b16 %v555
    %v564 = vunpack.c.h.b16 %v555
    %v565 = vunpack.c.l.b16 %v556
    %v566 = vunpack.c.h.b16 %v556
    %v567 = vunpack.c.l.b16 %v557
    %v568 = vunpack.c.h.b16 %v557
    %v569 = vunpack.c.l.b16 %v558
    %v570 = vunpack.c.h.b16 %v558
    %v571 = vpack.c.b16 %v563, %v563
    %v572 = vpack.c.b16 %v564, %v564
    %v573 = vpack.c.b16 %v565, %v565
    %v574 = vpack.c.b16 %v566, %v566
    %v575 = vpack.c.b16 %v567, %v567
    %v576 = vpack.c.b16 %v568, %v568
    %v577 = vpack.c.b16 %v569, %v569
    %v578 = vpack.c.b16 %v570, %v570
    %587 = vst [vmem:[#allocation10] sm:$0xf] %v571
    %588 = vst [vmem:[#allocation10 + $0x4] sm:$0xf] %v572
    %589 = vst [vmem:[#allocation10 + $0x8] sm:$0xf] %v573
    %590 = vst [vmem:[#allocation10 + $0xc] sm:$0xf] %v574
    %591 = vst [vmem:[#allocation10 + $0x10] sm:$0xf] %v575
    %592 = vst [vmem:[#allocation10 + $0x14] sm:$0xf] %v576
    %593 = vst [vmem:[#allocation10 + $0x18] sm:$0xf] %v577
    %594 = vst [vmem:[#allocation10 + $0x1c] sm:$0xf] %v578
    // Predicated region
    $region46: #{tpu_custom_call.1} parent=1 // pred_check
      _
    $region47: #{tpu_custom_call.1} parent=1 // pred_check_branch
      %596 = sbr.rel (0) target = $region49
    $region48: #{tpu_custom_call.1} parent=1 // pred_region
      %s598 = ssub.s32 512, 512
      %599 = vsyncadd [#allocation4], %s598
      %s600 = sshll.u32 [#allocation10], 4
      %s601 = int_to_ptr.vmem [resolvable:$true] %s600
      %606 = dma.vmem_to_hbm [thread:$0]  %s601, 512, %s7, [#allocation4], 64, 64, 4
    $region49: #{tpu_custom_call.1} parent=1 // pred_fallthru
      _
    // Predicated region
    $region50: #{tpu_custom_call.1} parent=1 // pred_check
      _
    $region51: #{tpu_custom_call.1} parent=1 // pred_check_branch
      %608 = sbr.rel (0) target = $region53
    $region52: #{tpu_custom_call.1} parent=1 // pred_region
      %609 = dma.done [#allocation4], 512
    $region53: #{tpu_custom_call.1} parent=1 // pred_fallthru
      _
    %610 = vsyncpa [#allocation3], 1
    %611 = vsyncpa [#allocation6], 1
    %612 = vsyncpa [#allocation9], 1
    %613 = vsyncpa [#allocation4], 1

</llo_original>
